<compile_context>
chip_gen: v7x
topology: tpu7x:2x2x1
jax: 0.10.0
libtpu: 0.0.40
codegen_flags: <defaults>
</compile_context>

<pallas_src>
import jax
import jax.numpy as jnp
from jax import lax
from jax.experimental import pallas as pl
from jax.experimental.pallas import tpu as pltpu

_LANE = 128                # lane width
_SUBLANE = 8               # f32 sublane count
_EPS = 1e-12               # torch F.normalize default eps
_TILE_BUDGET = 24 << 20    # VMEM bytes targeted for pipelined tiles
_SQRT_HALF = 0.7071067811865476


def _round_up(x, m):
    return ((x + m - 1) // m) * m


# ---------------------------------------------------------------------------
# In-kernel math helpers
# ---------------------------------------------------------------------------

def _erf(x):
    """erf via Abramowitz & Stegun 7.1.26 (|error| <= 1.5e-7), f32 in/out.

    Uses only exp (EUP slot) and VALU ops, so it lowers on every TPU gen
    without relying on a native erf lowering rule.
    """
    ax = jnp.abs(x)
    t = 1.0 / (1.0 + jnp.float32(0.3275911) * ax)
    poly = t * (jnp.float32(0.254829592)
                + t * (jnp.float32(-0.284496736)
                       + t * (jnp.float32(1.421413741)
                              + t * (jnp.float32(-1.453152027)
                                     + t * jnp.float32(1.061405429)))))
    e = 1.0 - poly * jnp.exp(-(ax * ax))
    return jnp.where(x < 0, -e, e)


def _epilogue(y_f32, b_ref, o_ref):
    """bias + exact GELU + L2 normalize (torch F.normalize semantics)."""
    y = y_f32 + b_ref[...].astype(jnp.float32)
    g = 0.5 * y * (1.0 + _erf(y * jnp.float32(_SQRT_HALF)))
    sq = jnp.sum(g * g, axis=-1, keepdims=True)             # XLU reduce
    inv = lax.rsqrt(jnp.maximum(sq, jnp.float32(_EPS * _EPS)))  # EUP rsqrt
    o_ref[...] = (g * inv).astype(o_ref.dtype)


# ---------------------------------------------------------------------------
# Kernels
# ---------------------------------------------------------------------------

def _fused_kernel(x_ref, w_ref, b_ref, o_ref):
    """Single-K fast path: whole contraction dim resident, no scratch."""
    y = lax.dot_general(
        x_ref[...], w_ref[...],
        dimension_numbers=(((1,), (1,)), ((), ())),   # x @ W^T, no transpose copy
        preferred_element_type=jnp.float32,
    )
    _epilogue(y, b_ref, o_ref)


def _acc_kernel(x_ref, w_ref, b_ref, o_ref, acc_ref):
    """Grid = (batch tiles, K tiles). f32 accumulator, epilogue on last K."""
    k = pl.program_id(1)
    part = lax.dot_general(
        x_ref[...], w_ref[...],
        dimension_numbers=(((1,), (1,)), ((), ())),
        preferred_element_type=jnp.float32,
    )

    @pl.when(k == 0)
    def _store_first():                 # direct store: no zero-init round-trip
        acc_ref[...] = part

    @pl.when(k != 0)
    def _accumulate():
        acc_ref[...] += part

    @pl.when(k == pl.num_programs(1) - 1)
    def _finalize():
        _epilogue(acc_ref[...], b_ref, o_ref)


# ---------------------------------------------------------------------------
# Tiling / VMEM sizing
# ---------------------------------------------------------------------------

def _choose_block_m(batch, d_out_p, block_k, in_bytes, out_bytes, acc_bytes,
                    budget):
    """Largest batch tile (multiple of 8) that fits the VMEM budget, then
    capped so the batch axis has >=4 grid steps (megacore) and chosen to
    divide round_up(batch, 8) (no wrapper-side batch padding copy)."""
    fixed = 2 * d_out_p * block_k * in_bytes + 2 * d_out_p * in_bytes
    per_row = (2 * block_k * in_bytes + 2 * d_out_p * out_bytes
               + acc_bytes * d_out_p)
    avail = max(budget - fixed, per_row * _SUBLANE)
    bm = (avail // per_row) // _SUBLANE * _SUBLANE
    bm = max(_SUBLANE, min(int(bm), 1024))

    b8 = _round_up(batch, _SUBLANE)
    target = _round_up(pl.cdiv(b8, 4), _SUBLANE)   # aim for >= 4 batch steps
    bm = min(bm, max(target, _SUBLANE), b8)
    while b8 % bm:                                  # terminates at bm == 8
        bm -= _SUBLANE
    return int(bm)


def _vmem_limit(block_m, block_k, d_out_p, in_bytes, out_bytes, acc_bytes):
    total = (2 * block_m * block_k * in_bytes      # x tile (double-buffered)
             + 2 * d_out_p * block_k * in_bytes    # weight tile
             + 2 * d_out_p * in_bytes              # bias
             + 2 * block_m * d_out_p * out_bytes   # out tile
             + acc_bytes * block_m * d_out_p)      # f32 accumulator (multi-K)
    limit = total + total // 4 + (2 << 20)
    return int(min(64 << 20, max(limit, 16 << 20)))


# ---------------------------------------------------------------------------
# Public wrapper
# ---------------------------------------------------------------------------

def make_text_encoder1(weight, bias):
    """Returns apply(x) == F.normalize(GELU(x @ W.T + b), dim=-1).

    weight: (D_out, D_in); bias: (D_out,). Padding/layout of the parameters
    happens once here (not on every call).
    """
    d_out, d_in = weight.shape
    in_bytes = jnp.dtype(weight.dtype).itemsize

    d_out_p = _round_up(d_out, _LANE)
    d_in_128 = _round_up(d_in, _LANE)

    # Keep the whole contraction dim resident when the double-buffered weight
    # slab is small; otherwise stream K in 512-wide chunks with an accumulator.
    if d_in_128 <= 512 or 2 * d_out_p * d_in_128 * in_bytes <= (8 << 20):
        block_k = d_in_128
    else:
        block_k = 512
    d_in_p = _round_up(d_in, block_k)
    single_k = (block_k == d_in_p)

    # Pad parameters once (no-op for the canonical 512x512 module).
    w = weight
    if (d_out_p, d_in_p) != (d_out, d_in):
        w = jnp.pad(w, ((0, d_out_p - d_out), (0, d_in_p - d_in)))
    b2 = bias.reshape(1, d_out)
    if d_out_p != d_out:
        b2 = jnp.pad(b2, ((0, 0), (0, d_out_p - d_out)))
    w = jax.device_put(w)
    b2 = jax.device_put(b2)

    @jax.jit
    def _apply(x_in, w_p, b_p):
        B, d_in_x = x_in.shape
        assert d_in_x == d_in, "input feature dim mismatch"
        out_bytes = jnp.dtype(x_in.dtype).itemsize
        acc_bytes = 0 if single_k else 4

        block_m = _choose_block_m(B, d_out_p, block_k, in_bytes, out_bytes,
                                  acc_bytes, _TILE_BUDGET)
        B_p = _round_up(B, block_m)      # block_m divides round_up(B, 8)

        x = x_in
        if (B_p, d_in_p) != (B, d_in):
            x = jnp.pad(x, ((0, B_p - B), (0, d_in_p - d_in)))

        vmem_limit = _vmem_limit(block_m, block_k, d_out_p, in_bytes,
                                 out_bytes, acc_bytes)

        if single_k:
            grid_spec = pltpu.PrefetchScalarGridSpec(
                num_scalar_prefetch=0,
                grid=(B_p // block_m,),
                in_specs=[
                    pl.BlockSpec((block_m, d_in_p), lambda i: (i, 0)),
                    pl.BlockSpec((d_out_p, d_in_p), lambda i: (0, 0)),  # resident
                    pl.BlockSpec((1, d_out_p), lambda i: (0, 0)),       # resident
                ],
                out_specs=pl.BlockSpec((block_m, d_out_p), lambda i: (i, 0)),
            )
            kernel = _fused_kernel
            dims = ("parallel",)
        else:
            grid_spec = pltpu.PrefetchScalarGridSpec(
                num_scalar_prefetch=0,
                grid=(B_p // block_m, d_in_p // block_k),
                in_specs=[
                    pl.BlockSpec((block_m, block_k), lambda i, k: (i, k)),
                    pl.BlockSpec((d_out_p, block_k), lambda i, k: (0, k)),
                    pl.BlockSpec((1, d_out_p), lambda i, k: (0, 0)),
                ],
                out_specs=pl.BlockSpec((block_m, d_out_p), lambda i, k: (i, 0)),
                scratch_shapes=[pltpu.VMEM((block_m, d_out_p), jnp.float32)],
            )
            kernel = _acc_kernel
            dims = ("parallel", "arbitrary")

        out = pl.pallas_call(
            kernel,
            out_shape=jax.ShapeDtypeStruct((B_p, d_out_p), x_in.dtype),
            grid_spec=grid_spec,
            compiler_params=pltpu.CompilerParams(
                dimension_semantics=dims,
                vmem_limit_bytes=vmem_limit,
            ),
        )(x, w_p, b_p)

        if (B_p, d_out_p) != (B, d_out):
            out = out[:B, :d_out]
        return out

    def apply(text_features):
        return _apply(text_features, w, b2)

    return apply


if __name__ == "__main__":
    # Small shapes consistent with the module (input_size == output_size).
    batch, d_in, d_out = 8, 32, 32

    key = jax.random.PRNGKey(0)
    k_x, k_w, k_b = jax.random.split(key, 3)

    # Deterministic init mimicking nn.Linear's U(-1/sqrt(in), 1/sqrt(in)).
    bound = 1.0 / (d_in ** 0.5)
    weight = jax.random.uniform(k_w, (d_out, d_in), jnp.float32, -bound, bound)
    bias = jax.random.uniform(k_b, (d_out,), jnp.float32, -bound, bound)
    x = jax.random.normal(k_x, (batch, d_in), jnp.float32)

    encoder = make_text_encoder1(weight, bias)
    out = jax.block_until_ready(encoder(x))

    # Pure-JAX reference of the same math (exact erf GELU, torch normalize).
    y_ref = jnp.dot(x, weight.T, precision=lax.Precision.HIGHEST) + bias
    g_ref = 0.5 * y_ref * (1.0 + lax.erf(y_ref * (1.0 / jnp.sqrt(2.0))))
    n_ref = g_ref / jnp.maximum(
        jnp.linalg.norm(g_ref, axis=-1, keepdims=True), 1e-12
    )

    assert out.shape == (batch, d_out)
    max_err = float(jnp.max(jnp.abs(out - n_ref)))
    assert jnp.allclose(out, n_ref, atol=1e-4, rtol=1e-3), max_err

    print("KERNEL_OK")
</pallas_src>

<mosaic_0001>
module attributes {stable_mosaic.version = 11 : i64} {
  func.func @_fused_kernel(%arg0: i32, %arg1: memref<8x128xf32, #tpu.memory_space<vmem>>, %arg2: memref<128x128xf32, #tpu.memory_space<vmem>>, %arg3: memref<1x128xf32, #tpu.memory_space<vmem>>, %arg4: memref<8x128xf32, #tpu.memory_space<vmem>>) attributes {dimension_semantics = [#tpu.dimension_semantics<parallel>], iteration_bounds = array<i64: 1>, scalar_prefetch = 0 : i64, scratch_operands = 0 : i64, tpu.core_type = #tpu.core_type<tc>, window_params = [{transform_indices = @transform_0, window_bounds = array<i64: 8, 128>}, {pipeline_mode = #tpu.pipeline_mode<synchronous>, transform_indices = @transform_1, window_bounds = array<i64: 128, 128>}, {pipeline_mode = #tpu.pipeline_mode<synchronous>, transform_indices = @transform_2, window_bounds = array<i64: 1, 128>}, {transform_indices = @transform_3, window_bounds = array<i64: 8, 128>}]} {
    %c0 = arith.constant 0 : index
    %c0_0 = arith.constant 0 : index
    %0 = vector.load %arg1[%c0, %c0_0] : memref<8x128xf32, #tpu.memory_space<vmem>>, vector<8x128xf32>
    %c0_1 = arith.constant 0 : index
    %c0_2 = arith.constant 0 : index
    %1 = vector.load %arg2[%c0_1, %c0_2] : memref<128x128xf32, #tpu.memory_space<vmem>>, vector<128x128xf32>
    %cst = arith.constant dense<0.000000e+00> : vector<8x128xf32>
    %2 = tpu.matmul %0, %1, %cst {dimension_numbers = #tpu.dot_dimension_numbers<[1], [1], [0], [0], [0, 0, 1, 0], [], []>} : vector<8x128xf32>, vector<128x128xf32>, vector<8x128xf32> -> vector<8x128xf32>
    %c0_3 = arith.constant 0 : index
    %c0_4 = arith.constant 0 : index
    %3 = vector.load %arg3[%c0_3, %c0_4] : memref<1x128xf32, #tpu.memory_space<vmem>>, vector<1x128xf32>
    %4 = vector.broadcast %3 : vector<1x128xf32> to vector<8x128xf32>
    %5 = arith.addf %2, %4 : vector<8x128xf32>
    %cst_5 = arith.constant 5.000000e-01 : f32
    %6 = vector.broadcast %cst_5 : f32 to vector<8x128xf32>
    %7 = arith.mulf %6, %5 : vector<8x128xf32>
    %cst_6 = arith.constant 0.707106769 : f32
    %8 = vector.broadcast %cst_6 : f32 to vector<8x128xf32>
    %9 = arith.mulf %5, %8 : vector<8x128xf32>
    %10 = math.absf %9 : vector<8x128xf32>
    %cst_7 = arith.constant 0.327591091 : f32
    %11 = vector.broadcast %cst_7 : f32 to vector<8x128xf32>
    %12 = arith.mulf %11, %10 : vector<8x128xf32>
    %cst_8 = arith.constant 1.000000e+00 : f32
    %13 = vector.broadcast %cst_8 : f32 to vector<8x128xf32>
    %14 = arith.addf %13, %12 : vector<8x128xf32>
    %cst_9 = arith.constant 1.000000e+00 : f32
    %15 = vector.broadcast %cst_9 : f32 to vector<8x128xf32>
    %16 = arith.divf %15, %14 : vector<8x128xf32>
    %cst_10 = arith.constant 1.06140542 : f32
    %17 = vector.broadcast %cst_10 : f32 to vector<8x128xf32>
    %18 = arith.mulf %16, %17 : vector<8x128xf32>
    %cst_11 = arith.constant -1.45315206 : f32
    %19 = vector.broadcast %cst_11 : f32 to vector<8x128xf32>
    %20 = arith.addf %19, %18 : vector<8x128xf32>
    %21 = arith.mulf %16, %20 : vector<8x128xf32>
    %cst_12 = arith.constant 1.42141378 : f32
    %22 = vector.broadcast %cst_12 : f32 to vector<8x128xf32>
    %23 = arith.addf %22, %21 : vector<8x128xf32>
    %24 = arith.mulf %16, %23 : vector<8x128xf32>
    %cst_13 = arith.constant -0.284496725 : f32
    %25 = vector.broadcast %cst_13 : f32 to vector<8x128xf32>
    %26 = arith.addf %25, %24 : vector<8x128xf32>
    %27 = arith.mulf %16, %26 : vector<8x128xf32>
    %cst_14 = arith.constant 0.254829586 : f32
    %28 = vector.broadcast %cst_14 : f32 to vector<8x128xf32>
    %29 = arith.addf %28, %27 : vector<8x128xf32>
    %30 = arith.mulf %16, %29 : vector<8x128xf32>
    %31 = arith.mulf %10, %10 : vector<8x128xf32>
    %cst_15 = arith.constant 0.000000e+00 : f32
    %32 = vector.broadcast %cst_15 : f32 to vector<8x128xf32>
    %33 = arith.subf %32, %31 : vector<8x128xf32>
    %34 = math.exp %33 : vector<8x128xf32>
    %35 = arith.mulf %30, %34 : vector<8x128xf32>
    %cst_16 = arith.constant 1.000000e+00 : f32
    %36 = vector.broadcast %cst_16 : f32 to vector<8x128xf32>
    %37 = arith.subf %36, %35 : vector<8x128xf32>
    %cst_17 = arith.constant 0.000000e+00 : f32
    %38 = vector.broadcast %cst_17 : f32 to vector<8x128xf32>
    %39 = arith.cmpf olt, %9, %38 : vector<8x128xf32>
    %cst_18 = arith.constant 0.000000e+00 : f32
    %40 = vector.broadcast %cst_18 : f32 to vector<8x128xf32>
    %41 = arith.subf %40, %37 : vector<8x128xf32>
    %42 = arith.select %39, %41, %37 : vector<8x128xi1>, vector<8x128xf32>
    %cst_19 = arith.constant 1.000000e+00 : f32
    %43 = vector.broadcast %cst_19 : f32 to vector<8x128xf32>
    %44 = arith.addf %43, %42 : vector<8x128xf32>
    %45 = arith.mulf %7, %44 : vector<8x128xf32>
    %46 = arith.mulf %45, %45 : vector<8x128xf32>
    %cst_20 = arith.constant dense<0.000000e+00> : vector<8xf32>
    %47 = vector.multi_reduction <add>, %46, %cst_20 [1] : vector<8x128xf32> to vector<8xf32>
    %48 = vector.shape_cast %47 : vector<8xf32> to vector<8x1xf32>
    %cst_21 = arith.constant 1.000000e-24 : f32
    %49 = vector.broadcast %cst_21 : f32 to vector<8x1xf32>
    %50 = arith.maximumf %48, %49 : vector<8x1xf32>
    %51 = math.rsqrt %50 : vector<8x1xf32>
    %52 = vector.broadcast %51 : vector<8x1xf32> to vector<8x128xf32>
    %53 = arith.mulf %45, %52 : vector<8x128xf32>
    %c0_22 = arith.constant 0 : index
    %c0_23 = arith.constant 0 : index
    %54 = vector.load %arg4[%c0_22, %c0_23] : memref<8x128xf32, #tpu.memory_space<vmem>>, vector<8x128xf32>
    tpu.vector_store %arg4[%c0_22, %c0_23], %53 {strides = array<i32>} : memref<8x128xf32, #tpu.memory_space<vmem>>, vector<8x128xf32>,
    return
  }
  func.func @transform_0(%arg0: i32) -> (i32, i32) {
    %c0_i32 = arith.constant 0 : i32
    %c0_i32_0 = arith.constant 0 : i32
    return %arg0, %c0_i32 : i32, i32
  }
  func.func @transform_1(%arg0: i32) -> (i32, i32) {
    %c0_i32 = arith.constant 0 : i32
    %c0_i32_0 = arith.constant 0 : i32
    %c0_i32_1 = arith.constant 0 : i32
    return %c0_i32, %c0_i32_0 : i32, i32
  }
  func.func @transform_2(%arg0: i32) -> (i32, i32) {
    %c0_i32 = arith.constant 0 : i32
    %c0_i32_0 = arith.constant 0 : i32
    %c0_i32_1 = arith.constant 0 : i32
    return %c0_i32, %c0_i32_0 : i32, i32
  }
  func.func @transform_3(%arg0: i32) -> (i32, i32) {
    %c0_i32 = arith.constant 0 : i32
    %c0_i32_0 = arith.constant 0 : i32
    return %arg0, %c0_i32 : i32, i32
  }
}

</mosaic_0001>

<llo_original>
// kernel: _apply.1
$region0: #{_apply.1}
  #allocation0 [shape = 'u32[]', space=smem, size = 0x4, offset = 0x4, fixed_abs, tag = 'smem constant byte address 0x4 - core index']
  #allocation1 [shape = 'u32[144,128]{1,0:T(1,128)}', space=vmem, size = 0x12000, scoped, tag = 'internal scratch']
  %s0 = inlined_call_operand.vmem [shape: f32[8,128], index: 0, kind: input, shape index: {}]
  %s1 = inlined_call_operand.hbm [shape: f32[128,128], index: 1, kind: input, shape index: {}]
  %s2 = inlined_call_operand.vmem [shape: f32[1,128], index: 2, kind: input, shape index: {}]
  %s3 = inlined_call_operand.hbm [shape: f32[8,128], index: 3, kind: output, shape index: {}]
  %s4 = sld [smem:[#allocation0]]
  $region26: #{_apply.1} parent=0
    _
  %s6 = ssub.s32 1, %s4
  %s7 = scalar_select 0, %s6, %s4
  $region1: #{_apply.1} parent=0
    #allocation2 [shape = 'u8[65536]{0}', space=vmem, size = 0x10000, scoped, tag = 'input window, operand 1, single buffered']
    #allocation3 [shape = 's32[1]{0}', space=sflag, size = 0x4, scoped, tag = 'scoped memory for _apply.1']
    #allocation4 [shape = 's32[1]{0}', space=sflag, size = 0x4, scoped, tag = 'scoped memory for _apply.1']
    #allocation5 [shape = 'u8[4096]{0}', space=vmem, size = 0x1000, scoped, tag = 'output window, operand 0, single buffered']
    %8 = vsyncpa [#allocation3], 0
    %9 = vsyncpa [#allocation4], 0
    // Predicated region
    $region2: #{_apply.1} parent=1 // pred_check
      _
    $region3: #{_apply.1} parent=1 // pred_check_branch
      %11 = sbr.rel (0) target = $region5
    $region4: #{_apply.1} parent=1 // pred_region
      _
    $region5: #{_apply.1} parent=1 // pred_fallthru
      _
    // Predicated region
    $region6: #{_apply.1} parent=1 // pred_check
      _
    $region7: #{_apply.1} parent=1 // pred_check_branch
      %13 = sbr.rel (0) target = $region9
    $region8: #{_apply.1} parent=1 // pred_region
      %s15 = ssub.s32 2048, 2048
      %16 = vsyncadd [#allocation3], %s15
      %s17 = sshll.u32 [#allocation2], 4
      %s18 = int_to_ptr.vmem [resolvable:$true] %s17
      %23 = dma.hbm_to_vmem [thread:$0]  %s1, 2048, %s18, [#allocation3], 128, 128, 8
    $region9: #{_apply.1} parent=1 // pred_fallthru
      _
    // Predicated region
    $region10: #{_apply.1} parent=1 // pred_check
      _
    $region11: #{_apply.1} parent=1 // pred_check_branch
      %25 = sbr.rel (0) target = $region13
    $region12: #{_apply.1} parent=1 // pred_region
      _
    $region13: #{_apply.1} parent=1 // pred_fallthru
      _
    // Predicated region
    $region14: #{_apply.1} parent=1 // pred_check
      _
    $region15: #{_apply.1} parent=1 // pred_check_branch
      %27 = sbr.rel (0) target = $region17
    $region16: #{_apply.1} parent=1 // pred_region
      %28 = dma.done [#allocation3], 2048
    $region17: #{_apply.1} parent=1 // pred_fallthru
      _
    %v29 = vld [vmem:[%s0] sm:$0xff]
    %v30 = vld [vmem:[#allocation2] sm:$0xff]
    %v31 = vld [vmem:[#allocation2 + $0x8] sm:$0xff]
    %v32 = vld [vmem:[#allocation2 + $0x10] sm:$0xff]
    %v33 = vld [vmem:[#allocation2 + $0x18] sm:$0xff]
    %v34 = vld [vmem:[#allocation2 + $0x20] sm:$0xff]
    %v35 = vld [vmem:[#allocation2 + $0x28] sm:$0xff]
    %v36 = vld [vmem:[#allocation2 + $0x30] sm:$0xff]
    %v37 = vld [vmem:[#allocation2 + $0x38] sm:$0xff]
    %v38 = vld [vmem:[#allocation2 + $0x40] sm:$0xff]
    %v39 = vld [vmem:[#allocation2 + $0x48] sm:$0xff]
    %v40 = vld [vmem:[#allocation2 + $0x50] sm:$0xff]
    %v41 = vld [vmem:[#allocation2 + $0x58] sm:$0xff]
    %v42 = vld [vmem:[#allocation2 + $0x60] sm:$0xff]
    %v43 = vld [vmem:[#allocation2 + $0x68] sm:$0xff]
    %v44 = vld [vmem:[#allocation2 + $0x70] sm:$0xff]
    %v45 = vld [vmem:[#allocation2 + $0x78] sm:$0xff]
    %v46 = vld [vmem:[%s2] sm:$0x1]
    %v48 = vlaneseq
    %v49 = vshrl.u32 %v48, 7
    %v50 = vsub.s32 0, %v49
    %v51 = vrot.slane %v46, %v50
    %53 = vmatprep.subr.mxu0 0.0
    %54 = vmatpush1.xpose.msra.mxu0 %v30
    %55 = vmatprep.subr.mxu0 0.0
    %56 = vmatpush1.xpose.msra.mxu0 %v31
    %57 = vmatprep.subr.mxu0 0.0
    %58 = vmatpush1.xpose.msra.mxu0 %v32
    %59 = vmatprep.subr.mxu0 0.0
    %60 = vmatpush1.xpose.msra.mxu0 %v33
    %61 = vmatprep.subr.mxu0 0.0
    %62 = vmatpush1.xpose.msra.mxu0 %v34
    %63 = vmatprep.subr.mxu0 0.0
    %64 = vmatpush1.xpose.msra.mxu0 %v35
    %65 = vmatprep.subr.mxu0 0.0
    %66 = vmatpush1.xpose.msra.mxu0 %v36
    %67 = vmatprep.subr.mxu0 0.0
    %68 = vmatpush1.xpose.msra.mxu0 %v37
    %69 = vmatprep.subr.mxu0 0.0
    %70 = vmatpush1.xpose.msra.mxu0 %v38
    %71 = vmatprep.subr.mxu0 0.0
    %72 = vmatpush1.xpose.msra.mxu0 %v39
    %73 = vmatprep.subr.mxu0 0.0
    %74 = vmatpush1.xpose.msra.mxu0 %v40
    %75 = vmatprep.subr.mxu0 0.0
    %76 = vmatpush1.xpose.msra.mxu0 %v41
    %77 = vmatprep.subr.mxu0 0.0
    %78 = vmatpush1.xpose.msra.mxu0 %v42
    %79 = vmatprep.subr.mxu0 0.0
    %80 = vmatpush1.xpose.msra.mxu0 %v43
    %81 = vmatprep.subr.mxu0 0.0
    %82 = vmatpush1.xpose.msra.mxu0 %v44
    %83 = vmatprep.subr.mxu0 0.0
    %84 = vmatpush1.xpose.msra.mxu0 %v45
    %85 = vmatprep.subr.mxu0 0.0
    %86 = vmatpush1.xpose.msra.mxu0 0.0
    %87 = vmatprep.subr.mxu0 0.0
    %88 = vmatpush1.xpose.msra.mxu0 0.0
    %89 = vmatprep.subr.mxu0 0.0
    %90 = vmatpush1.xpose.msra.mxu0 0.0
    %91 = vmatprep.subr.mxu0 0.0
    %92 = vmatpush1.xpose.msra.mxu0 0.0
    %93 = vmatprep.subr.mxu0 0.0
    %94 = vmatpush1.xpose.msra.mxu0 0.0
    %95 = vmatprep.subr.mxu0 0.0
    %96 = vmatpush1.xpose.msra.mxu0 0.0
    %97 = vmatprep.subr.mxu0 0.0
    %98 = vmatpush1.xpose.msra.mxu0 0.0
    %99 = vmatprep.subr.mxu0 0.0
    %100 = vmatpush1.xpose.msra.mxu0 0.0
    %101 = vmatprep.subr.mxu0 0.0
    %102 = vmatpush1.xpose.msra.mxu0 0.0
    %103 = vmatprep.subr.mxu0 0.0
    %104 = vmatpush1.xpose.msra.mxu0 0.0
    %105 = vmatprep.subr.mxu0 0.0
    %106 = vmatpush1.xpose.msra.mxu0 0.0
    %107 = vmatprep.subr.mxu0 0.0
    %108 = vmatpush1.xpose.msra.mxu0 0.0
    %109 = vmatprep.subr.mxu0 0.0
    %110 = vmatpush1.xpose.msra.mxu0 0.0
    %111 = vmatprep.subr.mxu0 0.0
    %112 = vmatpush1.xpose.msra.mxu0 0.0
    %113 = vmatprep.subr.mxu0 0.0
    %114 = vmatpush1.xpose.msra.mxu0 0.0
    %115 = vmatprep.subr.mxu0 0.0
    %116 = vmatpush1.xpose.msra.mxu0 0.0
    %117 = vmatprep.mubr.f32.mxu0 0.0
    %118 = vmatmul.mubr.f32.gmra.mrb[0].mxu0 %v29
    %v119 = vpop.f32.mrb[0].mxu0
    %v120 = vadd.f32 %v51, %v119
    %v121 = vpop.f32.mrb[0].mxu0
    %122 = vdwg.mxu0
    %v123 = vmul.f32 %v120, 0.5
    %v124 = vmul.f32 %v120, 0.70710677
    %v125 = vand.u32 2147483647, %v124
    %v126 = vmul.f32 %v125, 0.3275911
    %v127 = vadd.f32 %v126, 1.0
    %v128 = vrcp.pop %v127
    %v129 = vmul.f32 1.0, %v128
    %v130 = vmul.f32 %v129, 1.0614054
    %v131 = vadd.f32 %v130, -1.4531521
    %v132 = vmul.f32 %v129, %v131
    %v133 = vadd.f32 %v132, 1.4214138
    %v134 = vmul.f32 %v129, %v133
    %v135 = vadd.f32 %v134, -0.28449672
    %v136 = vmul.f32 %v129, %v135
    %v137 = vadd.f32 %v136, 0.2548296
    %v138 = vmul.f32 %v129, %v137
    %v139 = vmul.f32 %v125, %v125
    %v140 = vsub.f32 0.0, %v139
    %v141 = vmul.f32 %v140, 1.442695
    %v142 = vpow.pop %v141
    %v143 = vmul.f32 %v138, %v142
    %v144 = vsub.f32 1.0, %v143
    %vm145 = vcmp.lt.f32.partialorder %v124, 0.0
    %v146 = vsub.f32 0.0, %v144
    %v147 = vsel %vm145, %v146, %v144
    %v148 = vadd.f32 %v147, 1.0
    %v149 = vmul.f32 %v123, %v148
    %v150 = vmul.f32 %v149, %v149
    %151 = vadd.xlane.f32.xlu0 %v150
    %v152 = vpop.xlane.xlu0 %151
    %v153 = vmax.f32 %v152, 1e-24
    %v154 = vrsqrt.pop %v153
    %v155 = vmul.f32 %v149, %v154
    %156 = vst [vmem:[#allocation5] sm:$0xff] %v155
    // Predicated region
    $region18: #{_apply.1} parent=1 // pred_check
      _
    $region19: #{_apply.1} parent=1 // pred_check_branch
      %158 = sbr.rel (0) target = $region21
    $region20: #{_apply.1} parent=1 // pred_region
      %s160 = ssub.s32 128, 128
      %161 = vsyncadd [#allocation4], %s160
      %s163 = sshll.u32 [#allocation5], 4
      %s164 = int_to_ptr.vmem [resolvable:$true] %s163
      %166 = dma.vmem_to_hbm [thread:$0]  %s164, 128, %s3, [#allocation4]
    $region21: #{_apply.1} parent=1 // pred_fallthru
      _
    // Predicated region
    $region22: #{_apply.1} parent=1 // pred_check
      _
    $region23: #{_apply.1} parent=1 // pred_check_branch
      %168 = sbr.rel (0) target = $region25
    $region24: #{_apply.1} parent=1 // pred_region
      %169 = dma.done [#allocation4], 128
    $region25: #{_apply.1} parent=1 // pred_fallthru
      _
    %170 = vsyncpa [#allocation3], 1
    %171 = vsyncpa [#allocation4], 1

</llo_original>
